<compile_context>
chip_gen: v5e
topology: v5e:2x2
jax: 0.10.0
libtpu: 0.0.40
codegen_flags: <defaults>
</compile_context>

<pallas_src>
import jax
import jax.numpy as jnp
from jax.experimental import pallas as pl
from jax.experimental.pallas import tpu as pltpu


def _round_up(x, m):
    return ((x + m - 1) // m) * m


def _pick_tm(np_):
    """Dst-tile size: largest of (512,256,128) dividing Np while keeping >=2
    dst tiles (v7x megacore needs >=2 iterations on the parallel axis)."""
    if np_ <= 128:
        return np_
    for t in (512, 256, 128):
        if np_ % t == 0 and np_ // t >= 2:
            return t
    return 128


def _pick_tk(k_):
    """K-tile size along the folded (relation*src) contraction axis."""
    for t in (1024, 512, 256, 128):
        if k_ % t == 0:
            return t
    return k_


def _mpnn_kernel(a_ref, hw_ref, h_ref, inv_ref, o_ref):
    k = pl.program_id(1)
    nk = pl.num_programs(1)

    # Single uniform MXU K-chain: out += A[i, k] @ HW[k].
    # A is int8 in HBM; upcast to bf16 here (free under the memory stall).
    part = jnp.dot(
        a_ref[...].astype(jnp.bfloat16),
        hw_ref[...],
        preferred_element_type=jnp.float32,
    )

    # Accumulate directly into the resident f32 output block (no scratch,
    # no zero-fill pass).
    @pl.when(k == 0)
    def _():
        o_ref[...] = part

    @pl.when(k != 0)
    def _():
        o_ref[...] += part

    # Epilogue on the last reduction step: deg division (precomputed on host
    # as 0.8/deg), residual mix, relu, zero-indegree passthrough. In place.
    @pl.when(k == nk - 1)
    def _():
        inv08 = inv_ref[...]          # [TM, 1]  = 0.8/deg, 0 where deg == 0
        h_i = h_ref[...]              # exact f32 dst-tile features
        m = o_ref[...] * inv08
        new_h = jnp.maximum(0.2 * h_i + m, 0.0)
        # DGL only reduces nodes that received mail -> keep old h otherwise.
        o_ref[...] = jnp.where(inv08 > 0.0, new_h, h_i)


@jax.jit
def mpnn_forward(adj, h, weight_r, deg):
    """adj: [R, N, N] (dst, src) f32 edge multiplicities, h: [N, F] f32,
    weight_r: [R, F, F] f32, deg: [N, 1] f32 in-degree.  Returns [N, F] f32."""
    R, N, _ = adj.shape
    F = h.shape[1]

    Np = _round_up(max(N, 8), 128)      # node axis: lane/sublane friendly
    Fp = _round_up(F, 128)              # feature axis: lane-dense
    K = R * Np                          # folded (relation, src) contraction
    TM = _pick_tm(Np)                   # dst tile
    TK = _pick_tk(K)                    # contraction tile

    # ---- Host-side prep (pure XLA) -------------------------------------
    # HW_r = H @ W_r once, in f32, then a single bf16 rounding for streaming.
    hw = jnp.einsum("nf,rfg->rng", h, weight_r)                 # [R, N, F] f32
    hw = jnp.pad(hw, ((0, 0), (0, Np - N), (0, Fp - F)))
    hw_flat = hw.reshape(K, Fp).astype(jnp.bfloat16)            # [R*Np, Fp]

    # A as int8: exact for edge multiplicities <= 127 (typical graphs).
    a = jnp.pad(adj, ((0, 0), (0, Np - N), (0, Np - N)))        # [R, Np, Np]
    a_flat = jnp.transpose(a, (1, 0, 2)).reshape(Np, K)         # [dst, r*src]
    a_i8 = a_flat.astype(jnp.int8)

    h32 = jnp.pad(h, ((0, Np - N), (0, Fp - F))).astype(jnp.float32)

    deg_p = jnp.pad(deg, ((0, Np - N), (0, 0))).astype(jnp.float32)
    inv08 = jnp.where(deg_p > 0.0, 0.8 / jnp.maximum(deg_p, 1.0), 0.0)

    grid = (Np // TM, K // TK)

    out = pl.pallas_call(
        _mpnn_kernel,
        out_shape=jax.ShapeDtypeStruct((Np, Fp), jnp.float32),
        grid_spec=pltpu.PrefetchScalarGridSpec(
            num_scalar_prefetch=0,
            grid=grid,
            in_specs=[
                # A tile (int8), streamed along the contraction
                pl.BlockSpec((TM, TK), lambda i, k: (i, k)),
                # precomputed HW tile (bf16), streamed along the contraction
                pl.BlockSpec((TK, Fp), lambda i, k: (k, 0)),
                # f32 dst-tile of H for the residual / passthrough path
                pl.BlockSpec((TM, Fp), lambda i, k: (i, 0)),
                # 0.8/deg per dst node
                pl.BlockSpec((TM, 1), lambda i, k: (i, 0)),
            ],
            # Output block index ignores k -> resident accumulator over the
            # whole reduction.
            out_specs=pl.BlockSpec((TM, Fp), lambda i, k: (i, 0)),
        ),
        compiler_params=pltpu.CompilerParams(
            # dst tiles split across TensorCores (v7x megacore); k reduces.
            dimension_semantics=("parallel", "arbitrary"),
            # Per-call VMEM ~ 2*TM*TK + 2*2*TK*Fp + 4*(2*TM*Fp) bytes: well
            # under the scoped default at these tiles; for very large graphs
            # sweep TM/TK upward and set vmem_limit_bytes explicitly
            # (v5e/v6e have 128 MiB physical, v7x 64 MiB).
        ),
    )(a_i8, hw_flat, h32, inv08)

    return out[:N, :F]


def _reference(h, weight_r, src, dst, etype, num_nodes):
    """Pure-JAX edge-level reference matching the DGL semantics."""
    indeg = jnp.zeros((num_nodes,), jnp.float32).at[dst].add(1.0)
    deg_dst = jnp.maximum(indeg[dst], 1.0)[:, None]
    msg = jnp.einsum("ef,efg->eg", h[src], weight_r[etype]) / deg_dst
    m = jnp.zeros_like(h).at[dst].add(msg)
    c = 0.2
    new_h = jax.nn.relu(c * h + (1 - c) * m)
    return jnp.where(indeg[:, None] > 0, new_h, h)


if __name__ == "__main__":
    key = jax.random.PRNGKey(0)
    k_w, k_h, k_src, k_dst, k_type = jax.random.split(key, 5)

    num_nodes = 16        # N
    feat_dim = 32         # F
    num_rels = 4          # R
    num_edges = 48        # E

    # xavier_uniform with gain = calculate_gain('relu') = sqrt(2);
    # fan_in = F*F, fan_out = R*F (PyTorch convention for a 3-D tensor).
    gain = jnp.sqrt(2.0)
    fan_in = feat_dim * feat_dim
    fan_out = num_rels * feat_dim
    bound = gain * jnp.sqrt(6.0 / (fan_in + fan_out))
    weight_r = jax.random.uniform(
        k_w, (num_rels, feat_dim, feat_dim), jnp.float32, -bound, bound
    )

    features = jax.random.normal(k_h, (num_nodes, feat_dim), jnp.float32)

    # Synthetic graph: random edge list with relation types.
    src = jax.random.randint(k_src, (num_edges,), 0, num_nodes)
    dst = jax.random.randint(k_dst, (num_edges,), 0, num_nodes)
    etype = jax.random.randint(k_type, (num_edges,), 0, num_rels)

    # Dense per-relation adjacency A[r, dst, src] with multiplicity + in-degree.
    adj = jnp.zeros((num_rels, num_nodes, num_nodes), jnp.float32)
    adj = adj.at[etype, dst, src].add(1.0)
    deg = adj.sum(axis=(0, 2))[:, None]   # [N, 1] in-degree ('deg' node data)

    # int8 A assumption: edge multiplicities must fit in int8.
    assert float(adj.max()) <= 127.0, "edge multiplicity exceeds int8 range"

    out = mpnn_forward(adj, features, weight_r, deg)
    out = jax.block_until_ready(out)

    ref = _reference(features, weight_r, src, dst, etype, num_nodes)
    assert out.shape == (num_nodes, feat_dim)
    # Only rounding source is the single bf16 cast of HW -> tight tolerance.
    assert jnp.allclose(out, ref, atol=1e-2, rtol=1e-2), "mismatch vs reference"

    print("KERNEL_OK")
</pallas_src>

<mosaic_0001>
module attributes {stable_mosaic.version = 11 : i64} {
  func.func @_mpnn_kernel(%arg0: i32, %arg1: i32, %arg2: memref<128x512xi8, #tpu.memory_space<vmem>>, %arg3: memref<512x128xbf16, #tpu.memory_space<vmem>>, %arg4: memref<128x128xf32, #tpu.memory_space<vmem>>, %arg5: memref<128x1xf32, #tpu.memory_space<vmem>>, %arg6: memref<128x128xf32, #tpu.memory_space<vmem>>) attributes {dimension_semantics = [#tpu.dimension_semantics<parallel>, #tpu.dimension_semantics<arbitrary>], iteration_bounds = array<i64: 1, 1>, scalar_prefetch = 0 : i64, scratch_operands = 0 : i64, tpu.core_type = #tpu.core_type<tc>, window_params = [{transform_indices = @transform_0, window_bounds = array<i64: 128, 512>}, {transform_indices = @transform_1, window_bounds = array<i64: 512, 128>}, {transform_indices = @transform_2, window_bounds = array<i64: 128, 128>}, {transform_indices = @transform_3, window_bounds = array<i64: 128, 1>}, {transform_indices = @transform_4, window_bounds = array<i64: 128, 128>}]} {
    %c0 = arith.constant 0 : index
    %c0_0 = arith.constant 0 : index
    %0 = vector.load %arg2[%c0, %c0_0] : memref<128x512xi8, #tpu.memory_space<vmem>>, vector<128x512xi8>
    %1 = arith.sitofp %0 : vector<128x512xi8> to vector<128x512xbf16>
    %c0_1 = arith.constant 0 : index
    %c0_2 = arith.constant 0 : index
    %2 = vector.load %arg3[%c0_1, %c0_2] : memref<512x128xbf16, #tpu.memory_space<vmem>>, vector<512x128xbf16>
    %cst = arith.constant dense<0.000000e+00> : vector<128x128xf32>
    %3 = tpu.matmul %1, %2, %cst {dimension_numbers = #tpu.dot_dimension_numbers<[1], [0], [0], [1], [0, 0, 1, 1], [], []>} : vector<128x512xbf16>, vector<512x128xbf16>, vector<128x128xf32> -> vector<128x128xf32>
    %c0_i32 = arith.constant 0 : i32
    %4 = arith.cmpi eq, %arg1, %c0_i32 : i32
    %5 = arith.extui %4 : i1 to i32
    %c0_i32_3 = arith.constant 0 : i32
    %6 = arith.cmpi ne, %5, %c0_i32_3 : i32
    scf.if %6 {
      %c0_8 = arith.constant 0 : index
      %c0_9 = arith.constant 0 : index
      %13 = vector.load %arg6[%c0_8, %c0_9] : memref<128x128xf32, #tpu.memory_space<vmem>>, vector<128x128xf32>
      tpu.vector_store %arg6[%c0_8, %c0_9], %3 {strides = array<i32>} : memref<128x128xf32, #tpu.memory_space<vmem>>, vector<128x128xf32>,
    } else {
    }
    %c0_i32_4 = arith.constant 0 : i32
    %7 = arith.cmpi ne, %arg1, %c0_i32_4 : i32
    %8 = arith.extui %7 : i1 to i32
    %c0_i32_5 = arith.constant 0 : i32
    %9 = arith.cmpi ne, %8, %c0_i32_5 : i32
    scf.if %9 {
      %c0_8 = arith.constant 0 : index
      %c0_9 = arith.constant 0 : index
      %13 = vector.load %arg6[%c0_8, %c0_9] : memref<128x128xf32, #tpu.memory_space<vmem>>, vector<128x128xf32>
      %14 = arith.addf %13, %3 : vector<128x128xf32>
      %c0_10 = arith.constant 0 : index
      %c0_11 = arith.constant 0 : index
      %15 = vector.load %arg6[%c0_10, %c0_11] : memref<128x128xf32, #tpu.memory_space<vmem>>, vector<128x128xf32>
      tpu.vector_store %arg6[%c0_10, %c0_11], %14 {strides = array<i32>} : memref<128x128xf32, #tpu.memory_space<vmem>>, vector<128x128xf32>,
    } else {
    }
    %c0_i32_6 = arith.constant 0 : i32
    %10 = arith.cmpi eq, %arg1, %c0_i32_6 : i32
    %11 = arith.extui %10 : i1 to i32
    %c0_i32_7 = arith.constant 0 : i32
    %12 = arith.cmpi ne, %11, %c0_i32_7 : i32
    scf.if %12 {
      %c0_8 = arith.constant 0 : index
      %c0_9 = arith.constant 0 : index
      %13 = vector.load %arg5[%c0_8, %c0_9] : memref<128x1xf32, #tpu.memory_space<vmem>>, vector<128x1xf32>
      %c0_10 = arith.constant 0 : index
      %c0_11 = arith.constant 0 : index
      %14 = vector.load %arg4[%c0_10, %c0_11] : memref<128x128xf32, #tpu.memory_space<vmem>>, vector<128x128xf32>
      %c0_12 = arith.constant 0 : index
      %c0_13 = arith.constant 0 : index
      %15 = vector.load %arg6[%c0_12, %c0_13] : memref<128x128xf32, #tpu.memory_space<vmem>>, vector<128x128xf32>
      %16 = vector.broadcast %13 : vector<128x1xf32> to vector<128x128xf32>
      %17 = arith.mulf %15, %16 : vector<128x128xf32>
      %cst_14 = arith.constant 2.000000e-01 : f32
      %18 = vector.broadcast %cst_14 : f32 to vector<128x128xf32>
      %19 = arith.mulf %18, %14 : vector<128x128xf32>
      %20 = arith.addf %19, %17 : vector<128x128xf32>
      %cst_15 = arith.constant 0.000000e+00 : f32
      %21 = vector.broadcast %cst_15 : f32 to vector<128x128xf32>
      %22 = arith.maximumf %20, %21 : vector<128x128xf32>
      %cst_16 = arith.constant 0.000000e+00 : f32
      %23 = vector.broadcast %cst_16 : f32 to vector<128x1xf32>
      %24 = arith.cmpf ogt, %13, %23 : vector<128x1xf32>
      %25 = vector.shape_cast %24 : vector<128x1xi1> to vector<128x1xi1>
      %26 = vector.broadcast %25 : vector<128x1xi1> to vector<128x128xi1>
      %27 = arith.select %26, %22, %14 : vector<128x128xi1>, vector<128x128xf32>
      %c0_17 = arith.constant 0 : index
      %c0_18 = arith.constant 0 : index
      %28 = vector.load %arg6[%c0_17, %c0_18] : memref<128x128xf32, #tpu.memory_space<vmem>>, vector<128x128xf32>
      tpu.vector_store %arg6[%c0_17, %c0_18], %27 {strides = array<i32>} : memref<128x128xf32, #tpu.memory_space<vmem>>, vector<128x128xf32>,
    } else {
    }
    return
  }
  func.func @transform_0(%arg0: i32, %arg1: i32) -> (i32, i32) {
    %c0_i32 = arith.constant 0 : i32
    return %arg0, %arg1 : i32, i32
  }
  func.func @transform_1(%arg0: i32, %arg1: i32) -> (i32, i32) {
    %c0_i32 = arith.constant 0 : i32
    %c0_i32_0 = arith.constant 0 : i32
    return %arg1, %c0_i32 : i32, i32
  }
  func.func @transform_2(%arg0: i32, %arg1: i32) -> (i32, i32) {
    %c0_i32 = arith.constant 0 : i32
    %c0_i32_0 = arith.constant 0 : i32
    return %arg0, %c0_i32 : i32, i32
  }
  func.func @transform_3(%arg0: i32, %arg1: i32) -> (i32, i32) {
    %c0_i32 = arith.constant 0 : i32
    %c0_i32_0 = arith.constant 0 : i32
    return %arg0, %c0_i32 : i32, i32
  }
  func.func @transform_4(%arg0: i32, %arg1: i32) -> (i32, i32) {
    %c0_i32 = arith.constant 0 : i32
    %c0_i32_0 = arith.constant 0 : i32
    return %arg0, %c0_i32 : i32, i32
  }
}

</mosaic_0001>

<llo_original>
// kernel: mpnn_forward.1
$region0: #{mpnn_forward.1}
  #allocation0 [shape = 'u32[]', space=smem, size = 0x4, offset = 0x4, fixed_abs, tag = 'smem constant byte address 0x4 - core index']
  #allocation1 [shape = 'u32[72,128]{1,0:T(1,128)}', space=vmem, size = 0x9000, scoped, tag = 'internal scratch']
  %s0 = inlined_call_operand.vmem [shape: s8[128,512], index: 0, kind: input, shape index: {}]
  %s1 = inlined_call_operand.vmem [shape: bf16[512,128], index: 1, kind: input, shape index: {}]
  %s2 = inlined_call_operand.vmem [shape: f32[128,128], index: 2, kind: input, shape index: {}]
  %s3 = inlined_call_operand.vmem [shape: f32[128,1], index: 3, kind: input, shape index: {}]
  %s4 = inlined_call_operand.vmem [shape: f32[128,128], index: 4, kind: output, shape index: {}]
  %s5 = sld [smem:[#allocation0]]
  $region38: #{mpnn_forward.1} parent=0
    _
  %s7 = ssub.s32 1, %s5
  %s8 = scalar_select 0, %s7, %s5
  // Predicated region
  $region2: #{mpnn_forward.1} parent=0 // pred_check
    _
  $region3: #{mpnn_forward.1} parent=0 // pred_check_branch
    %10 = sbr.rel (0) target = $region5
  $region4: #{mpnn_forward.1} parent=0 // pred_region
    _
  $region5: #{mpnn_forward.1} parent=0 // pred_fallthru
    _
  // Predicated region
  $region6: #{mpnn_forward.1} parent=0 // pred_check
    _
  $region7: #{mpnn_forward.1} parent=0 // pred_check_branch
    %12 = sbr.rel (0) target = $region9
  $region8: #{mpnn_forward.1} parent=0 // pred_region
    _
  $region9: #{mpnn_forward.1} parent=0 // pred_fallthru
    _
  // Predicated region
  $region10: #{mpnn_forward.1} parent=0 // pred_check
    _
  $region11: #{mpnn_forward.1} parent=0 // pred_check_branch
    %14 = sbr.rel (0) target = $region13
  $region12: #{mpnn_forward.1} parent=0 // pred_region
    _
  $region13: #{mpnn_forward.1} parent=0 // pred_fallthru
    _
  // Predicated region
  $region14: #{mpnn_forward.1} parent=0 // pred_check
    _
  $region15: #{mpnn_forward.1} parent=0 // pred_check_branch
    %16 = sbr.rel (0) target = $region17
  $region16: #{mpnn_forward.1} parent=0 // pred_region
    _
  $region17: #{mpnn_forward.1} parent=0 // pred_fallthru
    _
  %v17 = vld [vmem:[%s0] sm:$0xff]
  %v18 = vld [vmem:[%s0 + $0x8] sm:$0xff]
  %v19 = vld [vmem:[%s0 + $0x10] sm:$0xff]
  %v20 = vld [vmem:[%s0 + $0x18] sm:$0xff]
  %v21 = vld [vmem:[%s0 + $0x20] sm:$0xff]
  %v22 = vld [vmem:[%s0 + $0x28] sm:$0xff]
  %v23 = vld [vmem:[%s0 + $0x30] sm:$0xff]
  %v24 = vld [vmem:[%s0 + $0x38] sm:$0xff]
  %v25 = vld [vmem:[%s0 + $0x40] sm:$0xff]
  %v26 = vld [vmem:[%s0 + $0x48] sm:$0xff]
  %v27 = vld [vmem:[%s0 + $0x50] sm:$0xff]
  %v28 = vld [vmem:[%s0 + $0x58] sm:$0xff]
  %v29 = vld [vmem:[%s0 + $0x60] sm:$0xff]
  %v30 = vld [vmem:[%s0 + $0x68] sm:$0xff]
  %v31 = vld [vmem:[%s0 + $0x70] sm:$0xff]
  %v32 = vld [vmem:[%s0 + $0x78] sm:$0xff]
  %v33 = vunpack.c.0.s8 %v17
  %v34 = vunpack.c.0.s8 %v18
  %v35 = vunpack.c.0.s8 %v19
  %v36 = vunpack.c.0.s8 %v20
  %v37 = vunpack.c.1.s8 %v17
  %v38 = vunpack.c.1.s8 %v18
  %v39 = vunpack.c.1.s8 %v19
  %v40 = vunpack.c.1.s8 %v20
  %v41 = vunpack.c.2.s8 %v17
  %v42 = vunpack.c.2.s8 %v18
  %v43 = vunpack.c.2.s8 %v19
  %v44 = vunpack.c.2.s8 %v20
  %v45 = vunpack.c.3.s8 %v17
  %v46 = vunpack.c.3.s8 %v18
  %v47 = vunpack.c.3.s8 %v19
  %v48 = vunpack.c.3.s8 %v20
  %v49 = vunpack.c.0.s8 %v21
  %v50 = vunpack.c.0.s8 %v22
  %v51 = vunpack.c.0.s8 %v23
  %v52 = vunpack.c.0.s8 %v24
  %v53 = vunpack.c.1.s8 %v21
  %v54 = vunpack.c.1.s8 %v22
  %v55 = vunpack.c.1.s8 %v23
  %v56 = vunpack.c.1.s8 %v24
  %v57 = vunpack.c.2.s8 %v21
  %v58 = vunpack.c.2.s8 %v22
  %v59 = vunpack.c.2.s8 %v23
  %v60 = vunpack.c.2.s8 %v24
  %v61 = vunpack.c.3.s8 %v21
  %v62 = vunpack.c.3.s8 %v22
  %v63 = vunpack.c.3.s8 %v23
  %v64 = vunpack.c.3.s8 %v24
  %v65 = vunpack.c.0.s8 %v25
  %v66 = vunpack.c.0.s8 %v26
  %v67 = vunpack.c.0.s8 %v27
  %v68 = vunpack.c.0.s8 %v28
  %v69 = vunpack.c.1.s8 %v25
  %v70 = vunpack.c.1.s8 %v26
  %v71 = vunpack.c.1.s8 %v27
  %v72 = vunpack.c.1.s8 %v28
  %v73 = vunpack.c.2.s8 %v25
  %v74 = vunpack.c.2.s8 %v26
  %v75 = vunpack.c.2.s8 %v27
  %v76 = vunpack.c.2.s8 %v28
  %v77 = vunpack.c.3.s8 %v25
  %v78 = vunpack.c.3.s8 %v26
  %v79 = vunpack.c.3.s8 %v27
  %v80 = vunpack.c.3.s8 %v28
  %v81 = vunpack.c.0.s8 %v29
  %v82 = vunpack.c.0.s8 %v30
  %v83 = vunpack.c.0.s8 %v31
  %v84 = vunpack.c.0.s8 %v32
  %v85 = vunpack.c.1.s8 %v29
  %v86 = vunpack.c.1.s8 %v30
  %v87 = vunpack.c.1.s8 %v31
  %v88 = vunpack.c.1.s8 %v32
  %v89 = vunpack.c.2.s8 %v29
  %v90 = vunpack.c.2.s8 %v30
  %v91 = vunpack.c.2.s8 %v31
  %v92 = vunpack.c.2.s8 %v32
  %v93 = vunpack.c.3.s8 %v29
  %v94 = vunpack.c.3.s8 %v30
  %v95 = vunpack.c.3.s8 %v31
  %v96 = vunpack.c.3.s8 %v32
  %v97 = vcvt.s32.f32 %v33
  %v98 = vcvt.s32.f32 %v34
  %v99 = vcvt.s32.f32 %v35
  %v100 = vcvt.s32.f32 %v36
  %v101 = vcvt.s32.f32 %v37
  %v102 = vcvt.s32.f32 %v38
  %v103 = vcvt.s32.f32 %v39
  %v104 = vcvt.s32.f32 %v40
  %v105 = vcvt.s32.f32 %v41
  %v106 = vcvt.s32.f32 %v42
  %v107 = vcvt.s32.f32 %v43
  %v108 = vcvt.s32.f32 %v44
  %v109 = vcvt.s32.f32 %v45
  %v110 = vcvt.s32.f32 %v46
  %v111 = vcvt.s32.f32 %v47
  %v112 = vcvt.s32.f32 %v48
  %v113 = vcvt.s32.f32 %v49
  %v114 = vcvt.s32.f32 %v50
  %v115 = vcvt.s32.f32 %v51
  %v116 = vcvt.s32.f32 %v52
  %v117 = vcvt.s32.f32 %v53
  %v118 = vcvt.s32.f32 %v54
  %v119 = vcvt.s32.f32 %v55
  %v120 = vcvt.s32.f32 %v56
  %v121 = vcvt.s32.f32 %v57
  %v122 = vcvt.s32.f32 %v58
  %v123 = vcvt.s32.f32 %v59
  %v124 = vcvt.s32.f32 %v60
  %v125 = vcvt.s32.f32 %v61
  %v126 = vcvt.s32.f32 %v62
  %v127 = vcvt.s32.f32 %v63
  %v128 = vcvt.s32.f32 %v64
  %v129 = vcvt.s32.f32 %v65
  %v130 = vcvt.s32.f32 %v66
  %v131 = vcvt.s32.f32 %v67
  %v132 = vcvt.s32.f32 %v68
  %v133 = vcvt.s32.f32 %v69
  %v134 = vcvt.s32.f32 %v70
  %v135 = vcvt.s32.f32 %v71
  %v136 = vcvt.s32.f32 %v72
  %v137 = vcvt.s32.f32 %v73
  %v138 = vcvt.s32.f32 %v74
  %v139 = vcvt.s32.f32 %v75
  %v140 = vcvt.s32.f32 %v76
  %v141 = vcvt.s32.f32 %v77
  %v142 = vcvt.s32.f32 %v78
  %v143 = vcvt.s32.f32 %v79
  %v144 = vcvt.s32.f32 %v80
  %v145 = vcvt.s32.f32 %v81
  %v146 = vcvt.s32.f32 %v82
  %v147 = vcvt.s32.f32 %v83
  %v148 = vcvt.s32.f32 %v84
  %v149 = vcvt.s32.f32 %v85
  %v150 = vcvt.s32.f32 %v86
  %v151 = vcvt.s32.f32 %v87
  %v152 = vcvt.s32.f32 %v88
  %v153 = vcvt.s32.f32 %v89
  %v154 = vcvt.s32.f32 %v90
  %v155 = vcvt.s32.f32 %v91
  %v156 = vcvt.s32.f32 %v92
  %v157 = vcvt.s32.f32 %v93
  %v158 = vcvt.s32.f32 %v94
  %v159 = vcvt.s32.f32 %v95
  %v160 = vcvt.s32.f32 %v96
  %v161 = vpack.c.bf16 %v101, %v97
  %v162 = vpack.c.bf16 %v102, %v98
  %v163 = vpack.c.bf16 %v103, %v99
  %v164 = vpack.c.bf16 %v104, %v100
  %v165 = vpack.c.bf16 %v109, %v105
  %v166 = vpack.c.bf16 %v110, %v106
  %v167 = vpack.c.bf16 %v111, %v107
  %v168 = vpack.c.bf16 %v112, %v108
  %v169 = vpack.c.bf16 %v117, %v113
  %v170 = vpack.c.bf16 %v118, %v114
  %v171 = vpack.c.bf16 %v119, %v115
  %v172 = vpack.c.bf16 %v120, %v116
  %v173 = vpack.c.bf16 %v125, %v121
  %v174 = vpack.c.bf16 %v126, %v122
  %v175 = vpack.c.bf16 %v127, %v123
  %v176 = vpack.c.bf16 %v128, %v124
  %v177 = vpack.c.bf16 %v133, %v129
  %v178 = vpack.c.bf16 %v134, %v130
  %v179 = vpack.c.bf16 %v135, %v131
  %v180 = vpack.c.bf16 %v136, %v132
  %v181 = vpack.c.bf16 %v141, %v137
  %v182 = vpack.c.bf16 %v142, %v138
  %v183 = vpack.c.bf16 %v143, %v139
  %v184 = vpack.c.bf16 %v144, %v140
  %v185 = vpack.c.bf16 %v149, %v145
  %v186 = vpack.c.bf16 %v150, %v146
  %v187 = vpack.c.bf16 %v151, %v147
  %v188 = vpack.c.bf16 %v152, %v148
  %v189 = vpack.c.bf16 %v157, %v153
  %v190 = vpack.c.bf16 %v158, %v154
  %v191 = vpack.c.bf16 %v159, %v155
  %v192 = vpack.c.bf16 %v160, %v156
  %v193 = vld [vmem:[%s1] sm:$0xf]
  %v194 = vld [vmem:[%s1 + $0x4] sm:$0xf]
  %v195 = vld [vmem:[%s1 + $0x8] sm:$0xf]
  %v196 = vld [vmem:[%s1 + $0xc] sm:$0xf]
  %v197 = vld [vmem:[%s1 + $0x10] sm:$0xf]
  %v198 = vld [vmem:[%s1 + $0x14] sm:$0xf]
  %v199 = vld [vmem:[%s1 + $0x18] sm:$0xf]
  %v200 = vld [vmem:[%s1 + $0x1c] sm:$0xf]
  %v201 = vld [vmem:[%s1 + $0x20] sm:$0xf]
  %v202 = vld [vmem:[%s1 + $0x24] sm:$0xf]
  %v203 = vld [vmem:[%s1 + $0x28] sm:$0xf]
  %v204 = vld [vmem:[%s1 + $0x2c] sm:$0xf]
  %v205 = vld [vmem:[%s1 + $0x30] sm:$0xf]
  %v206 = vld [vmem:[%s1 + $0x34] sm:$0xf]
  %v207 = vld [vmem:[%s1 + $0x38] sm:$0xf]
  %v208 = vld [vmem:[%s1 + $0x3c] sm:$0xf]
  %v209 = vld [vmem:[%s1 + $0x40] sm:$0xf]
  %v210 = vld [vmem:[%s1 + $0x44] sm:$0xf]
  %v211 = vld [vmem:[%s1 + $0x48] sm:$0xf]
  %v212 = vld [vmem:[%s1 + $0x4c] sm:$0xf]
  %v213 = vld [vmem:[%s1 + $0x50] sm:$0xf]
  %v214 = vld [vmem:[%s1 + $0x54] sm:$0xf]
  %v215 = vld [vmem:[%s1 + $0x58] sm:$0xf]
  %v216 = vld [vmem:[%s1 + $0x5c] sm:$0xf]
  %v217 = vld [vmem:[%s1 + $0x60] sm:$0xf]
  %v218 = vld [vmem:[%s1 + $0x64] sm:$0xf]
  %v219 = vld [vmem:[%s1 + $0x68] sm:$0xf]
  %v220 = vld [vmem:[%s1 + $0x6c] sm:$0xf]
  %v221 = vld [vmem:[%s1 + $0x70] sm:$0xf]
  %v222 = vld [vmem:[%s1 + $0x74] sm:$0xf]
  %v223 = vld [vmem:[%s1 + $0x78] sm:$0xf]
  %v224 = vld [vmem:[%s1 + $0x7c] sm:$0xf]
  %v225 = vld [vmem:[%s1 + $0x80] sm:$0xf]
  %v226 = vld [vmem:[%s1 + $0x84] sm:$0xf]
  %v227 = vld [vmem:[%s1 + $0x88] sm:$0xf]
  %v228 = vld [vmem:[%s1 + $0x8c] sm:$0xf]
  %v229 = vld [vmem:[%s1 + $0x90] sm:$0xf]
  %v230 = vld [vmem:[%s1 + $0x94] sm:$0xf]
  %v231 = vld [vmem:[%s1 + $0x98] sm:$0xf]
  %v232 = vld [vmem:[%s1 + $0x9c] sm:$0xf]
  %v233 = vld [vmem:[%s1 + $0xa0] sm:$0xf]
  %v234 = vld [vmem:[%s1 + $0xa4] sm:$0xf]
  %v235 = vld [vmem:[%s1 + $0xa8] sm:$0xf]
  %v236 = vld [vmem:[%s1 + $0xac] sm:$0xf]
  %v237 = vld [vmem:[%s1 + $0xb0] sm:$0xf]
  %v238 = vld [vmem:[%s1 + $0xb4] sm:$0xf]
  %v239 = vld [vmem:[%s1 + $0xb8] sm:$0xf]
  %v240 = vld [vmem:[%s1 + $0xbc] sm:$0xf]
  %v241 = vld [vmem:[%s1 + $0xc0] sm:$0xf]
  %v242 = vld [vmem:[%s1 + $0xc4] sm:$0xf]
  %v243 = vld [vmem:[%s1 + $0xc8] sm:$0xf]
  %v244 = vld [vmem:[%s1 + $0xcc] sm:$0xf]
  %v245 = vld [vmem:[%s1 + $0xd0] sm:$0xf]
  %v246 = vld [vmem:[%s1 + $0xd4] sm:$0xf]
  %v247 = vld [vmem:[%s1 + $0xd8] sm:$0xf]
  %v248 = vld [vmem:[%s1 + $0xdc] sm:$0xf]
  %v249 = vld [vmem:[%s1 + $0xe0] sm:$0xf]
  %v250 = vld [vmem:[%s1 + $0xe4] sm:$0xf]
  %v251 = vld [vmem:[%s1 + $0xe8] sm:$0xf]
  %v252 = vld [vmem:[%s1 + $0xec] sm:$0xf]
  %v253 = vld [vmem:[%s1 + $0xf0] sm:$0xf]
  %v254 = vld [vmem:[%s1 + $0xf4] sm:$0xf]
  %v255 = vld [vmem:[%s1 + $0xf8] sm:$0xf]
  %v256 = vld [vmem:[%s1 + $0xfc] sm:$0xf]
  %v321 = vunpack.c.l.b16 %v193
  %v322 = vunpack.c.l.b16 %v194
  %v323 = vunpack.c.l.b16 %v195
  %v324 = vunpack.c.l.b16 %v196
  %v325 = vunpack.c.l.b16 %v197
  %v326 = vunpack.c.l.b16 %v198
  %v327 = vunpack.c.l.b16 %v199
  %v328 = vunpack.c.l.b16 %v200
  %v329 = vunpack.c.l.b16 %v201
  %v330 = vunpack.c.l.b16 %v202
  %v331 = vunpack.c.l.b16 %v203
  %v332 = vunpack.c.l.b16 %v204
  %v333 = vunpack.c.l.b16 %v205
  %v334 = vunpack.c.l.b16 %v206
  %v335 = vunpack.c.l.b16 %v207
  %v336 = vunpack.c.l.b16 %v208
  %v337 = vunpack.c.l.b16 %v209
  %v338 = vunpack.c.l.b16 %v210
  %v339 = vunpack.c.l.b16 %v211
  %v340 = vunpack.c.l.b16 %v212
  %v341 = vunpack.c.l.b16 %v213
  %v342 = vunpack.c.l.b16 %v214
  %v343 = vunpack.c.l.b16 %v215
  %v344 = vunpack.c.l.b16 %v216
  %v345 = vunpack.c.l.b16 %v217
  %v346 = vunpack.c.l.b16 %v218
  %v347 = vunpack.c.l.b16 %v219
  %v348 = vunpack.c.l.b16 %v220
  %v349 = vunpack.c.l.b16 %v221
  %v350 = vunpack.c.l.b16 %v222
  %v351 = vunpack.c.l.b16 %v223
  %v352 = vunpack.c.l.b16 %v224
  %v353 = vunpack.c.l.b16 %v225
  %v354 = vunpack.c.l.b16 %v226
  %v355 = vunpack.c.l.b16 %v227
  %v356 = vunpack.c.l.b16 %v228
  %v357 = vunpack.c.l.b16 %v229
  %v358 = vunpack.c.l.b16 %v230
  %v359 = vunpack.c.l.b16 %v231
  %v360 = vunpack.c.l.b16 %v232
  %v361 = vunpack.c.l.b16 %v233
  %v362 = vunpack.c.l.b16 %v234
  %v363 = vunpack.c.l.b16 %v235
  %v364 = vunpack.c.l.b16 %v236
  %v365 = vunpack.c.l.b16 %v237
  %v366 = vunpack.c.l.b16 %v238
  %v367 = vunpack.c.l.b16 %v239
  %v368 = vunpack.c.l.b16 %v240
  %v369 = vunpack.c.l.b16 %v241
  %v370 = vunpack.c.l.b16 %v242
  %v371 = vunpack.c.l.b16 %v243
  %v372 = vunpack.c.l.b16 %v244
  %v373 = vunpack.c.l.b16 %v245
  %v374 = vunpack.c.l.b16 %v246
  %v375 = vunpack.c.l.b16 %v247
  %v376 = vunpack.c.l.b16 %v248
  %v377 = vunpack.c.l.b16 %v249
  %v378 = vunpack.c.l.b16 %v250
  %v379 = vunpack.c.l.b16 %v251
  %v380 = vunpack.c.l.b16 %v252
  %v381 = vunpack.c.l.b16 %v253
  %v382 = vunpack.c.l.b16 %v254
  %v383 = vunpack.c.l.b16 %v255
  %v384 = vunpack.c.l.b16 %v256
  %v385 = vpack.c.b16 %v322, %v321
  %v386 = vpack.c.b16 %v324, %v323
  %v387 = vpack.c.b16 %v326, %v325
  %v388 = vpack.c.b16 %v328, %v327
  %v389 = vpack.c.b16 %v330, %v329
  %v390 = vpack.c.b16 %v332, %v331
  %v391 = vpack.c.b16 %v334, %v333
  %v392 = vpack.c.b16 %v336, %v335
  %v393 = vpack.c.b16 %v338, %v337
  %v394 = vpack.c.b16 %v340, %v339
  %v395 = vpack.c.b16 %v342, %v341
  %v396 = vpack.c.b16 %v344, %v343
  %v397 = vpack.c.b16 %v346, %v345
  %v398 = vpack.c.b16 %v348, %v347
  %v399 = vpack.c.b16 %v350, %v349
  %v400 = vpack.c.b16 %v352, %v351
  %v401 = vpack.c.b16 %v354, %v353
  %v402 = vpack.c.b16 %v356, %v355
  %v403 = vpack.c.b16 %v358, %v357
  %v404 = vpack.c.b16 %v360, %v359
  %v405 = vpack.c.b16 %v362, %v361
  %v406 = vpack.c.b16 %v364, %v363
  %v407 = vpack.c.b16 %v366, %v365
  %v408 = vpack.c.b16 %v368, %v367
  %v409 = vpack.c.b16 %v370, %v369
  %v410 = vpack.c.b16 %v372, %v371
  %v411 = vpack.c.b16 %v374, %v373
  %v412 = vpack.c.b16 %v376, %v375
  %v413 = vpack.c.b16 %v378, %v377
  %v414 = vpack.c.b16 %v380, %v379
  %v415 = vpack.c.b16 %v382, %v381
  %v416 = vpack.c.b16 %v384, %v383
  %449 = vmatpush.bf16.msra.mxu0 %v392
  %450 = vmatpush.bf16.msra.mxu0 %v391
  %451 = vmatpush.bf16.msra.mxu0 %v390
  %452 = vmatpush.bf16.msra.mxu0 %v389
  %453 = vmatpush.bf16.msra.mxu0 %v388
  %454 = vmatpush.bf16.msra.mxu0 %v387
  %455 = vmatpush.bf16.msra.mxu0 %v386
  %456 = vmatpush.bf16.msra.mxu0 %v385
  %457 = vmatmul.bf16.gmra.mxu0 %v161
  %v458 = vpop.f32.mrf.mxu0
  %v459 = vadd.f32 0.0, %v458
  %v460 = vpop.f32.mrf.mxu0
  %v461 = vadd.f32 0.0, %v460
  %462 = vmatmul.bf16.gmra.mxu0 %v165
  %v463 = vpop.f32.mrf.mxu0
  %v464 = vadd.f32 0.0, %v463
  %v465 = vpop.f32.mrf.mxu0
  %v466 = vadd.f32 0.0, %v465
  %467 = vmatmul.bf16.gmra.mxu0 %v169
  %v468 = vpop.f32.mrf.mxu0
  %v469 = vadd.f32 0.0, %v468
  %v470 = vpop.f32.mrf.mxu0
  %v471 = vadd.f32 0.0, %v470
  %472 = vmatmul.bf16.gmra.mxu0 %v173
  %v473 = vpop.f32.mrf.mxu0
  %v474 = vadd.f32 0.0, %v473
  %v475 = vpop.f32.mrf.mxu0
  %v476 = vadd.f32 0.0, %v475
  %477 = vmatmul.bf16.gmra.mxu0 %v177
  %v478 = vpop.f32.mrf.mxu0
  %v479 = vadd.f32 0.0, %v478
  %v480 = vpop.f32.mrf.mxu0
  %v481 = vadd.f32 0.0, %v480
  %482 = vmatmul.bf16.gmra.mxu0 %v181
  %v483 = vpop.f32.mrf.mxu0
  %v484 = vadd.f32 0.0, %v483
  %v485 = vpop.f32.mrf.mxu0
  %v486 = vadd.f32 0.0, %v485
  %487 = vmatmul.bf16.gmra.mxu0 %v185
  %v488 = vpop.f32.mrf.mxu0
  %v489 = vadd.f32 0.0, %v488
  %v490 = vpop.f32.mrf.mxu0
  %v491 = vadd.f32 0.0, %v490
  %492 = vmatmul.bf16.gmra.mxu0 %v189
  %v493 = vpop.f32.mrf.mxu0
  %v494 = vadd.f32 0.0, %v493
  %v495 = vpop.f32.mrf.mxu0
  %v496 = vadd.f32 0.0, %v495
  %497 = vdwg.mxu0
  %498 = vmatpush.bf16.msra.mxu0 %v400
  %499 = vmatpush.bf16.msra.mxu0 %v399
  %500 = vmatpush.bf16.msra.mxu0 %v398
  %501 = vmatpush.bf16.msra.mxu0 %v397
  %502 = vmatpush.bf16.msra.mxu0 %v396
  %503 = vmatpush.bf16.msra.mxu0 %v395
  %504 = vmatpush.bf16.msra.mxu0 %v394
  %505 = vmatpush.bf16.msra.mxu0 %v393
  %506 = vmatmul.bf16.gmra.mxu0 %v162
  %v507 = vpop.f32.mrf.mxu0
  %v508 = vadd.f32 %v459, %v507
  %v509 = vpop.f32.mrf.mxu0
  %v510 = vadd.f32 %v461, %v509
  %511 = vmatmul.bf16.gmra.mxu0 %v166
  %v512 = vpop.f32.mrf.mxu0
  %v513 = vadd.f32 %v464, %v512
  %v514 = vpop.f32.mrf.mxu0
  %v515 = vadd.f32 %v466, %v514
  %516 = vmatmul.bf16.gmra.mxu0 %v170
  %v517 = vpop.f32.mrf.mxu0
  %v518 = vadd.f32 %v469, %v517
  %v519 = vpop.f32.mrf.mxu0
  %v520 = vadd.f32 %v471, %v519
  %521 = vmatmul.bf16.gmra.mxu0 %v174
  %v522 = vpop.f32.mrf.mxu0
  %v523 = vadd.f32 %v474, %v522
  %v524 = vpop.f32.mrf.mxu0
  %v525 = vadd.f32 %v476, %v524
  %526 = vmatmul.bf16.gmra.mxu0 %v178
  %v527 = vpop.f32.mrf.mxu0
  %v528 = vadd.f32 %v479, %v527
  %v529 = vpop.f32.mrf.mxu0
  %v530 = vadd.f32 %v481, %v529
  %531 = vmatmul.bf16.gmra.mxu0 %v182
  %v532 = vpop.f32.mrf.mxu0
  %v533 = vadd.f32 %v484, %v532
  %v534 = vpop.f32.mrf.mxu0
  %v535 = vadd.f32 %v486, %v534
  %536 = vmatmul.bf16.gmra.mxu0 %v186
  %v537 = vpop.f32.mrf.mxu0
  %v538 = vadd.f32 %v489, %v537
  %v539 = vpop.f32.mrf.mxu0
  %v540 = vadd.f32 %v491, %v539
  %541 = vmatmul.bf16.gmra.mxu0 %v190
  %v542 = vpop.f32.mrf.mxu0
  %v543 = vadd.f32 %v494, %v542
  %v544 = vpop.f32.mrf.mxu0
  %v545 = vadd.f32 %v496, %v544
  %546 = vdwg.mxu0
  %547 = vmatpush.bf16.msra.mxu0 %v408
  %548 = vmatpush.bf16.msra.mxu0 %v407
  %549 = vmatpush.bf16.msra.mxu0 %v406
  %550 = vmatpush.bf16.msra.mxu0 %v405
  %551 = vmatpush.bf16.msra.mxu0 %v404
  %552 = vmatpush.bf16.msra.mxu0 %v403
  %553 = vmatpush.bf16.msra.mxu0 %v402
  %554 = vmatpush.bf16.msra.mxu0 %v401
  %555 = vmatmul.bf16.gmra.mxu0 %v163
  %v556 = vpop.f32.mrf.mxu0
  %v557 = vadd.f32 %v508, %v556
  %v558 = vpop.f32.mrf.mxu0
  %v559 = vadd.f32 %v510, %v558
  %560 = vmatmul.bf16.gmra.mxu0 %v167
  %v561 = vpop.f32.mrf.mxu0
  %v562 = vadd.f32 %v513, %v561
  %v563 = vpop.f32.mrf.mxu0
  %v564 = vadd.f32 %v515, %v563
  %565 = vmatmul.bf16.gmra.mxu0 %v171
  %v566 = vpop.f32.mrf.mxu0
  %v567 = vadd.f32 %v518, %v566
  %v568 = vpop.f32.mrf.mxu0
  %v569 = vadd.f32 %v520, %v568
  %570 = vmatmul.bf16.gmra.mxu0 %v175
  %v571 = vpop.f32.mrf.mxu0
  %v572 = vadd.f32 %v523, %v571
  %v573 = vpop.f32.mrf.mxu0
  %v574 = vadd.f32 %v525, %v573
  %575 = vmatmul.bf16.gmra.mxu0 %v179
  %v576 = vpop.f32.mrf.mxu0
  %v577 = vadd.f32 %v528, %v576
  %v578 = vpop.f32.mrf.mxu0
  %v579 = vadd.f32 %v530, %v578
  %580 = vmatmul.bf16.gmra.mxu0 %v183
  %v581 = vpop.f32.mrf.mxu0
  %v582 = vadd.f32 %v533, %v581
  %v583 = vpop.f32.mrf.mxu0
  %v584 = vadd.f32 %v535, %v583
  %585 = vmatmul.bf16.gmra.mxu0 %v187
  %v586 = vpop.f32.mrf.mxu0
  %v587 = vadd.f32 %v538, %v586
  %v588 = vpop.f32.mrf.mxu0
  %v589 = vadd.f32 %v540, %v588
  %590 = vmatmul.bf16.gmra.mxu0 %v191
  %v591 = vpop.f32.mrf.mxu0
  %v592 = vadd.f32 %v543, %v591
  %v593 = vpop.f32.mrf.mxu0
  %v594 = vadd.f32 %v545, %v593
  %595 = vdwg.mxu0
  %596 = vmatpush.bf16.msra.mxu0 %v416
  %597 = vmatpush.bf16.msra.mxu0 %v415
  %598 = vmatpush.bf16.msra.mxu0 %v414
  %599 = vmatpush.bf16.msra.mxu0 %v413
  %600 = vmatpush.bf16.msra.mxu0 %v412
  %601 = vmatpush.bf16.msra.mxu0 %v411
  %602 = vmatpush.bf16.msra.mxu0 %v410
  %603 = vmatpush.bf16.msra.mxu0 %v409
  %604 = vmatmul.bf16.gmra.mxu0 %v164
  %v605 = vpop.f32.mrf.mxu0
  %v606 = vadd.f32 %v557, %v605
  %v607 = vpop.f32.mrf.mxu0
  %v608 = vadd.f32 %v559, %v607
  %609 = vmatmul.bf16.gmra.mxu0 %v168
  %v610 = vpop.f32.mrf.mxu0
  %v611 = vadd.f32 %v562, %v610
  %v612 = vpop.f32.mrf.mxu0
  %v613 = vadd.f32 %v564, %v612
  %614 = vmatmul.bf16.gmra.mxu0 %v172
  %v615 = vpop.f32.mrf.mxu0
  %v616 = vadd.f32 %v567, %v615
  %v617 = vpop.f32.mrf.mxu0
  %v618 = vadd.f32 %v569, %v617
  %619 = vmatmul.bf16.gmra.mxu0 %v176
  %v620 = vpop.f32.mrf.mxu0
  %v621 = vadd.f32 %v572, %v620
  %v622 = vpop.f32.mrf.mxu0
  %v623 = vadd.f32 %v574, %v622
  %624 = vmatmul.bf16.gmra.mxu0 %v180
  %v625 = vpop.f32.mrf.mxu0
  %v626 = vadd.f32 %v577, %v625
  %v627 = vpop.f32.mrf.mxu0
  %v628 = vadd.f32 %v579, %v627
  %629 = vmatmul.bf16.gmra.mxu0 %v184
  %v630 = vpop.f32.mrf.mxu0
  %v631 = vadd.f32 %v582, %v630
  %v632 = vpop.f32.mrf.mxu0
  %v633 = vadd.f32 %v584, %v632
  %634 = vmatmul.bf16.gmra.mxu0 %v188
  %v635 = vpop.f32.mrf.mxu0
  %v636 = vadd.f32 %v587, %v635
  %v637 = vpop.f32.mrf.mxu0
  %v638 = vadd.f32 %v589, %v637
  %639 = vmatmul.bf16.gmra.mxu0 %v192
  %v640 = vpop.f32.mrf.mxu0
  %v641 = vadd.f32 %v592, %v640
  %v642 = vpop.f32.mrf.mxu0
  %v643 = vadd.f32 %v594, %v642
  %644 = vdwg.mxu0
  %p645 = scmp.eq.s32.totalorder 0, 0
  // Predicated region
  $region18: #{mpnn_forward.1} parent=0 // pred_check
    %p646 = pneg %p645
  $region19: #{mpnn_forward.1} parent=0 // pred_check_branch
    %648 = sbr.rel (%p646) target = $region21
  $region20: #{mpnn_forward.1} parent=0 // pred_region
    %649 = vst [vmem:[%s4] sm:$0xff] %v606
    %650 = vst [vmem:[%s4 + $0x8] sm:$0xff] %v608
    %651 = vst [vmem:[%s4 + $0x10] sm:$0xff] %v611
    %652 = vst [vmem:[%s4 + $0x18] sm:$0xff] %v613
    %653 = vst [vmem:[%s4 + $0x20] sm:$0xff] %v616
    %654 = vst [vmem:[%s4 + $0x28] sm:$0xff] %v618
    %655 = vst [vmem:[%s4 + $0x30] sm:$0xff] %v621
    %656 = vst [vmem:[%s4 + $0x38] sm:$0xff] %v623
    %657 = vst [vmem:[%s4 + $0x40] sm:$0xff] %v626
    %658 = vst [vmem:[%s4 + $0x48] sm:$0xff] %v628
    %659 = vst [vmem:[%s4 + $0x50] sm:$0xff] %v631
    %660 = vst [vmem:[%s4 + $0x58] sm:$0xff] %v633
    %661 = vst [vmem:[%s4 + $0x60] sm:$0xff] %v636
    %662 = vst [vmem:[%s4 + $0x68] sm:$0xff] %v638
    %663 = vst [vmem:[%s4 + $0x70] sm:$0xff] %v641
    %664 = vst [vmem:[%s4 + $0x78] sm:$0xff] %v643
  $region21: #{mpnn_forward.1} parent=0 // pred_fallthru
    _
  %p665 = scmp.ne.s32.totalorder 0, 0
  // Predicated region
  $region22: #{mpnn_forward.1} parent=0 // pred_check
    %p666 = pneg %p665
  $region23: #{mpnn_forward.1} parent=0 // pred_check_branch
    %668 = sbr.rel (%p666) target = $region25
  $region24: #{mpnn_forward.1} parent=0 // pred_region
    %v669 = vld [vmem:[%s4] sm:$0xff]
    %v670 = vld [vmem:[%s4 + $0x8] sm:$0xff]
    %v671 = vld [vmem:[%s4 + $0x10] sm:$0xff]
    %v672 = vld [vmem:[%s4 + $0x18] sm:$0xff]
    %v673 = vld [vmem:[%s4 + $0x20] sm:$0xff]
    %v674 = vld [vmem:[%s4 + $0x28] sm:$0xff]
    %v675 = vld [vmem:[%s4 + $0x30] sm:$0xff]
    %v676 = vld [vmem:[%s4 + $0x38] sm:$0xff]
    %v677 = vld [vmem:[%s4 + $0x40] sm:$0xff]
    %v678 = vld [vmem:[%s4 + $0x48] sm:$0xff]
    %v679 = vld [vmem:[%s4 + $0x50] sm:$0xff]
    %v680 = vld [vmem:[%s4 + $0x58] sm:$0xff]
    %v681 = vld [vmem:[%s4 + $0x60] sm:$0xff]
    %v682 = vld [vmem:[%s4 + $0x68] sm:$0xff]
    %v683 = vld [vmem:[%s4 + $0x70] sm:$0xff]
    %v684 = vld [vmem:[%s4 + $0x78] sm:$0xff]
    %v685 = vadd.f32 %v669, %v606
    %v686 = vadd.f32 %v670, %v608
    %v687 = vadd.f32 %v671, %v611
    %v688 = vadd.f32 %v672, %v613
    %v689 = vadd.f32 %v673, %v616
    %v690 = vadd.f32 %v674, %v618
    %v691 = vadd.f32 %v675, %v621
    %v692 = vadd.f32 %v676, %v623
    %v693 = vadd.f32 %v677, %v626
    %v694 = vadd.f32 %v678, %v628
    %v695 = vadd.f32 %v679, %v631
    %v696 = vadd.f32 %v680, %v633
    %v697 = vadd.f32 %v681, %v636
    %v698 = vadd.f32 %v682, %v638
    %v699 = vadd.f32 %v683, %v641
    %v700 = vadd.f32 %v684, %v643
    %701 = vst [vmem:[%s4] sm:$0xff] %v685
    %702 = vst [vmem:[%s4 + $0x8] sm:$0xff] %v686
    %703 = vst [vmem:[%s4 + $0x10] sm:$0xff] %v687
    %704 = vst [vmem:[%s4 + $0x18] sm:$0xff] %v688
    %705 = vst [vmem:[%s4 + $0x20] sm:$0xff] %v689
    %706 = vst [vmem:[%s4 + $0x28] sm:$0xff] %v690
    %707 = vst [vmem:[%s4 + $0x30] sm:$0xff] %v691
    %708 = vst [vmem:[%s4 + $0x38] sm:$0xff] %v692
    %709 = vst [vmem:[%s4 + $0x40] sm:$0xff] %v693
    %710 = vst [vmem:[%s4 + $0x48] sm:$0xff] %v694
    %711 = vst [vmem:[%s4 + $0x50] sm:$0xff] %v695
    %712 = vst [vmem:[%s4 + $0x58] sm:$0xff] %v696
    %713 = vst [vmem:[%s4 + $0x60] sm:$0xff] %v697
    %714 = vst [vmem:[%s4 + $0x68] sm:$0xff] %v698
    %715 = vst [vmem:[%s4 + $0x70] sm:$0xff] %v699
    %716 = vst [vmem:[%s4 + $0x78] sm:$0xff] %v700
  $region25: #{mpnn_forward.1} parent=0 // pred_fallthru
    _
  // Predicated region
  $region26: #{mpnn_forward.1} parent=0 // pred_check
    %p717 = pneg %p645
  $region27: #{mpnn_forward.1} parent=0 // pred_check_branch
    %719 = sbr.rel (%p717) target = $region29
  $region28: #{mpnn_forward.1} parent=0 // pred_region
    %v720 = vld [vmem:[%s3] sm:$0xff]
    %v721 = vld [vmem:[%s3 + $0x8] sm:$0xff]
    %v722 = vld [vmem:[%s3 + $0x10] sm:$0xff]
    %v723 = vld [vmem:[%s3 + $0x18] sm:$0xff]
    %v724 = vld [vmem:[%s3 + $0x20] sm:$0xff]
    %v725 = vld [vmem:[%s3 + $0x28] sm:$0xff]
    %v726 = vld [vmem:[%s3 + $0x30] sm:$0xff]
    %v727 = vld [vmem:[%s3 + $0x38] sm:$0xff]
    %v728 = vld [vmem:[%s3 + $0x40] sm:$0xff]
    %v729 = vld [vmem:[%s3 + $0x48] sm:$0xff]
    %v730 = vld [vmem:[%s3 + $0x50] sm:$0xff]
    %v731 = vld [vmem:[%s3 + $0x58] sm:$0xff]
    %v732 = vld [vmem:[%s3 + $0x60] sm:$0xff]
    %v733 = vld [vmem:[%s3 + $0x68] sm:$0xff]
    %v734 = vld [vmem:[%s3 + $0x70] sm:$0xff]
    %v735 = vld [vmem:[%s3 + $0x78] sm:$0xff]
    %v736 = vld [vmem:[%s2] sm:$0xff]
    %v737 = vld [vmem:[%s2 + $0x8] sm:$0xff]
    %v738 = vld [vmem:[%s2 + $0x10] sm:$0xff]
    %v739 = vld [vmem:[%s2 + $0x18] sm:$0xff]
    %v740 = vld [vmem:[%s2 + $0x20] sm:$0xff]
    %v741 = vld [vmem:[%s2 + $0x28] sm:$0xff]
    %v742 = vld [vmem:[%s2 + $0x30] sm:$0xff]
    %v743 = vld [vmem:[%s2 + $0x38] sm:$0xff]
    %v744 = vld [vmem:[%s2 + $0x40] sm:$0xff]
    %v745 = vld [vmem:[%s2 + $0x48] sm:$0xff]
    %v746 = vld [vmem:[%s2 + $0x50] sm:$0xff]
    %v747 = vld [vmem:[%s2 + $0x58] sm:$0xff]
    %v748 = vld [vmem:[%s2 + $0x60] sm:$0xff]
    %v749 = vld [vmem:[%s2 + $0x68] sm:$0xff]
    %v750 = vld [vmem:[%s2 + $0x70] sm:$0xff]
    %v751 = vld [vmem:[%s2 + $0x78] sm:$0xff]
    %v752 = vld [vmem:[%s4] sm:$0xff]
    %v753 = vld [vmem:[%s4 + $0x8] sm:$0xff]
    %v754 = vld [vmem:[%s4 + $0x10] sm:$0xff]
    %v755 = vld [vmem:[%s4 + $0x18] sm:$0xff]
    %v756 = vld [vmem:[%s4 + $0x20] sm:$0xff]
    %v757 = vld [vmem:[%s4 + $0x28] sm:$0xff]
    %v758 = vld [vmem:[%s4 + $0x30] sm:$0xff]
    %v759 = vld [vmem:[%s4 + $0x38] sm:$0xff]
    %v760 = vld [vmem:[%s4 + $0x40] sm:$0xff]
    %v761 = vld [vmem:[%s4 + $0x48] sm:$0xff]
    %v762 = vld [vmem:[%s4 + $0x50] sm:$0xff]
    %v763 = vld [vmem:[%s4 + $0x58] sm:$0xff]
    %v764 = vld [vmem:[%s4 + $0x60] sm:$0xff]
    %v765 = vld [vmem:[%s4 + $0x68] sm:$0xff]
    %v766 = vld [vmem:[%s4 + $0x70] sm:$0xff]
    %v767 = vld [vmem:[%s4 + $0x78] sm:$0xff]
    %769 = vset.pattern.permute.xlu0 0
    %770 = vperm.xlu0 %769, %v720
    %v771 = vpop.permute.xlu0 %770
    %774 = vset.pattern.permute.xlu0 0
    %775 = vperm.xlu0 %774, %v721
    %v776 = vpop.permute.xlu0 %775
    %779 = vset.pattern.permute.xlu0 0
    %780 = vperm.xlu0 %779, %v722
    %v781 = vpop.permute.xlu0 %780
    %784 = vset.pattern.permute.xlu0 0
    %785 = vperm.xlu0 %784, %v723
    %v786 = vpop.permute.xlu0 %785
    %789 = vset.pattern.permute.xlu0 0
    %790 = vperm.xlu0 %789, %v724
    %v791 = vpop.permute.xlu0 %790
    %794 = vset.pattern.permute.xlu0 0
    %795 = vperm.xlu0 %794, %v725
    %v796 = vpop.permute.xlu0 %795
    %799 = vset.pattern.permute.xlu0 0
    %800 = vperm.xlu0 %799, %v726
    %v801 = vpop.permute.xlu0 %800
    %804 = vset.pattern.permute.xlu0 0
    %805 = vperm.xlu0 %804, %v727
    %v806 = vpop.permute.xlu0 %805
    %809 = vset.pattern.permute.xlu0 0
    %810 = vperm.xlu0 %809, %v728
    %v811 = vpop.permute.xlu0 %810
    %814 = vset.pattern.permute.xlu0 0
    %815 = vperm.xlu0 %814, %v729
    %v816 = vpop.permute.xlu0 %815
    %819 = vset.pattern.permute.xlu0 0
    %820 = vperm.xlu0 %819, %v730
    %v821 = vpop.permute.xlu0 %820
    %824 = vset.pattern.permute.xlu0 0
    %825 = vperm.xlu0 %824, %v731
    %v826 = vpop.permute.xlu0 %825
    %829 = vset.pattern.permute.xlu0 0
    %830 = vperm.xlu0 %829, %v732
    %v831 = vpop.permute.xlu0 %830
    %834 = vset.pattern.permute.xlu0 0
    %835 = vperm.xlu0 %834, %v733
    %v836 = vpop.permute.xlu0 %835
    %839 = vset.pattern.permute.xlu0 0
    %840 = vperm.xlu0 %839, %v734
    %v841 = vpop.permute.xlu0 %840
    %844 = vset.pattern.permute.xlu0 0
    %845 = vperm.xlu0 %844, %v735
    %v846 = vpop.permute.xlu0 %845
    %v848 = vmul.f32 %v752, %v771
    %v849 = vmul.f32 %v753, %v776
    %v850 = vmul.f32 %v754, %v781
    %v851 = vmul.f32 %v755, %v786
    %v852 = vmul.f32 %v756, %v791
    %v853 = vmul.f32 %v757, %v796
    %v854 = vmul.f32 %v758, %v801
    %v855 = vmul.f32 %v759, %v806
    %v856 = vmul.f32 %v760, %v811
    %v857 = vmul.f32 %v761, %v816
    %v858 = vmul.f32 %v762, %v821
    %v859 = vmul.f32 %v763, %v826
    %v860 = vmul.f32 %v764, %v831
    %v861 = vmul.f32 %v765, %v836
    %v862 = vmul.f32 %v766, %v841
    %v863 = vmul.f32 %v767, %v846
    %v864 = vmul.f32 %v736, 0.2
    %v865 = vmul.f32 %v737, 0.2
    %v866 = vmul.f32 %v738, 0.2
    %v867 = vmul.f32 %v739, 0.2
    %v868 = vmul.f32 %v740, 0.2
    %v869 = vmul.f32 %v741, 0.2
    %v870 = vmul.f32 %v742, 0.2
    %v871 = vmul.f32 %v743, 0.2
    %v872 = vmul.f32 %v744, 0.2
    %v873 = vmul.f32 %v745, 0.2
    %v874 = vmul.f32 %v746, 0.2
    %v875 = vmul.f32 %v747, 0.2
    %v876 = vmul.f32 %v748, 0.2
    %v877 = vmul.f32 %v749, 0.2
    %v878 = vmul.f32 %v750, 0.2
    %v879 = vmul.f32 %v751, 0.2
    %v880 = vadd.f32 %v864, %v848
    %v881 = vadd.f32 %v865, %v849
    %v882 = vadd.f32 %v866, %v850
    %v883 = vadd.f32 %v867, %v851
    %v884 = vadd.f32 %v868, %v852
    %v885 = vadd.f32 %v869, %v853
    %v886 = vadd.f32 %v870, %v854
    %v887 = vadd.f32 %v871, %v855
    %v888 = vadd.f32 %v872, %v856
    %v889 = vadd.f32 %v873, %v857
    %v890 = vadd.f32 %v874, %v858
    %v891 = vadd.f32 %v875, %v859
    %v892 = vadd.f32 %v876, %v860
    %v893 = vadd.f32 %v877, %v861
    %v894 = vadd.f32 %v878, %v862
    %v895 = vadd.f32 %v879, %v863
    %v896 = vmax.f32 %v880, 0.0
    %v897 = vmax.f32 %v881, 0.0
    %v898 = vmax.f32 %v882, 0.0
    %v899 = vmax.f32 %v883, 0.0
    %v900 = vmax.f32 %v884, 0.0
    %v901 = vmax.f32 %v885, 0.0
    %v902 = vmax.f32 %v886, 0.0
    %v903 = vmax.f32 %v887, 0.0
    %v904 = vmax.f32 %v888, 0.0
    %v905 = vmax.f32 %v889, 0.0
    %v906 = vmax.f32 %v890, 0.0
    %v907 = vmax.f32 %v891, 0.0
    %v908 = vmax.f32 %v892, 0.0
    %v909 = vmax.f32 %v893, 0.0
    %v910 = vmax.f32 %v894, 0.0
    %v911 = vmax.f32 %v895, 0.0
    %vm912 = vcmp.gt.f32.partialorder %v720, 0.0
    %vm913 = vcmp.gt.f32.partialorder %v721, 0.0
    %vm914 = vcmp.gt.f32.partialorder %v722, 0.0
    %vm915 = vcmp.gt.f32.partialorder %v723, 0.0
    %vm916 = vcmp.gt.f32.partialorder %v724, 0.0
    %vm917 = vcmp.gt.f32.partialorder %v725, 0.0
    %vm918 = vcmp.gt.f32.partialorder %v726, 0.0
    %vm919 = vcmp.gt.f32.partialorder %v727, 0.0
    %vm920 = vcmp.gt.f32.partialorder %v728, 0.0
    %vm921 = vcmp.gt.f32.partialorder %v729, 0.0
    %vm922 = vcmp.gt.f32.partialorder %v730, 0.0
    %vm923 = vcmp.gt.f32.partialorder %v731, 0.0
    %vm924 = vcmp.gt.f32.partialorder %v732, 0.0
    %vm925 = vcmp.gt.f32.partialorder %v733, 0.0
    %vm926 = vcmp.gt.f32.partialorder %v734, 0.0
    %vm927 = vcmp.gt.f32.partialorder %v735, 0.0
    %v928 = vsel %vm912, 1, 0
    %v929 = vsel %vm913, 1, 0
    %v930 = vsel %vm914, 1, 0
    %v931 = vsel %vm915, 1, 0
    %v932 = vsel %vm916, 1, 0
    %v933 = vsel %vm917, 1, 0
    %v934 = vsel %vm918, 1, 0
    %v935 = vsel %vm919, 1, 0
    %v936 = vsel %vm920, 1, 0
    %v937 = vsel %vm921, 1, 0
    %v938 = vsel %vm922, 1, 0
    %v939 = vsel %vm923, 1, 0
    %v940 = vsel %vm924, 1, 0
    %v941 = vsel %vm925, 1, 0
    %v942 = vsel %vm926, 1, 0
    %v943 = vsel %vm927, 1, 0
    %944 = vset.pattern.permute.xlu0 0
    %945 = vperm.xlu0 %944, %v928
    %v946 = vpop.permute.xlu0 %945
    %947 = vset.pattern.permute.xlu0 0
    %948 = vperm.xlu0 %947, %v929
    %v949 = vpop.permute.xlu0 %948
    %950 = vset.pattern.permute.xlu0 0
    %951 = vperm.xlu0 %950, %v930
    %v952 = vpop.permute.xlu0 %951
    %953 = vset.pattern.permute.xlu0 0
    %954 = vperm.xlu0 %953, %v931
    %v955 = vpop.permute.xlu0 %954
    %956 = vset.pattern.permute.xlu0 0
    %957 = vperm.xlu0 %956, %v932
    %v958 = vpop.permute.xlu0 %957
    %959 = vset.pattern.permute.xlu0 0
    %960 = vperm.xlu0 %959, %v933
    %v961 = vpop.permute.xlu0 %960
    %962 = vset.pattern.permute.xlu0 0
    %963 = vperm.xlu0 %962, %v934
    %v964 = vpop.permute.xlu0 %963
    %965 = vset.pattern.permute.xlu0 0
    %966 = vperm.xlu0 %965, %v935
    %v967 = vpop.permute.xlu0 %966
    %968 = vset.pattern.permute.xlu0 0
    %969 = vperm.xlu0 %968, %v936
    %v970 = vpop.permute.xlu0 %969
    %971 = vset.pattern.permute.xlu0 0
    %972 = vperm.xlu0 %971, %v937
    %v973 = vpop.permute.xlu0 %972
    %974 = vset.pattern.permute.xlu0 0
    %975 = vperm.xlu0 %974, %v938
    %v976 = vpop.permute.xlu0 %975
    %977 = vset.pattern.permute.xlu0 0
    %978 = vperm.xlu0 %977, %v939
    %v979 = vpop.permute.xlu0 %978
    %980 = vset.pattern.permute.xlu0 0
    %981 = vperm.xlu0 %980, %v940
    %v982 = vpop.permute.xlu0 %981
    %983 = vset.pattern.permute.xlu0 0
    %984 = vperm.xlu0 %983, %v941
    %v985 = vpop.permute.xlu0 %984
    %986 = vset.pattern.permute.xlu0 0
    %987 = vperm.xlu0 %986, %v942
    %v988 = vpop.permute.xlu0 %987
    %989 = vset.pattern.permute.xlu0 0
    %990 = vperm.xlu0 %989, %v943
    %v991 = vpop.permute.xlu0 %990
    %vm992 = vcmp.eq.s32.totalorder %v946, 1
    %vm993 = vcmp.eq.s32.totalorder %v949, 1
    %vm994 = vcmp.eq.s32.totalorder %v952, 1
    %vm995 = vcmp.eq.s32.totalorder %v955, 1
    %vm996 = vcmp.eq.s32.totalorder %v958, 1
    %vm997 = vcmp.eq.s32.totalorder %v961, 1
    %vm998 = vcmp.eq.s32.totalorder %v964, 1
    %vm999 = vcmp.eq.s32.totalorder %v967, 1
    %vm1000 = vcmp.eq.s32.totalorder %v970, 1
    %vm1001 = vcmp.eq.s32.totalorder %v973, 1
    %vm1002 = vcmp.eq.s32.totalorder %v976, 1
    %vm1003 = vcmp.eq.s32.totalorder %v979, 1
    %vm1004 = vcmp.eq.s32.totalorder %v982, 1
    %vm1005 = vcmp.eq.s32.totalorder %v985, 1
    %vm1006 = vcmp.eq.s32.totalorder %v988, 1
    %vm1007 = vcmp.eq.s32.totalorder %v991, 1
    %v1008 = vsel %vm992, %v896, %v736
    %v1009 = vsel %vm993, %v897, %v737
    %v1010 = vsel %vm994, %v898, %v738
    %v1011 = vsel %vm995, %v899, %v739
    %v1012 = vsel %vm996, %v900, %v740
    %v1013 = vsel %vm997, %v901, %v741
    %v1014 = vsel %vm998, %v902, %v742
    %v1015 = vsel %vm999, %v903, %v743
    %v1016 = vsel %vm1000, %v904, %v744
    %v1017 = vsel %vm1001, %v905, %v745
    %v1018 = vsel %vm1002, %v906, %v746
    %v1019 = vsel %vm1003, %v907, %v747
    %v1020 = vsel %vm1004, %v908, %v748
    %v1021 = vsel %vm1005, %v909, %v749
    %v1022 = vsel %vm1006, %v910, %v750
    %v1023 = vsel %vm1007, %v911, %v751
    %1024 = vst [vmem:[%s4] sm:$0xff] %v1008
    %1025 = vst [vmem:[%s4 + $0x8] sm:$0xff] %v1009
    %1026 = vst [vmem:[%s4 + $0x10] sm:$0xff] %v1010
    %1027 = vst [vmem:[%s4 + $0x18] sm:$0xff] %v1011
    %1028 = vst [vmem:[%s4 + $0x20] sm:$0xff] %v1012
    %1029 = vst [vmem:[%s4 + $0x28] sm:$0xff] %v1013
    %1030 = vst [vmem:[%s4 + $0x30] sm:$0xff] %v1014
    %1031 = vst [vmem:[%s4 + $0x38] sm:$0xff] %v1015
    %1032 = vst [vmem:[%s4 + $0x40] sm:$0xff] %v1016
    %1033 = vst [vmem:[%s4 + $0x48] sm:$0xff] %v1017
    %1034 = vst [vmem:[%s4 + $0x50] sm:$0xff] %v1018
    %1035 = vst [vmem:[%s4 + $0x58] sm:$0xff] %v1019
    %1036 = vst [vmem:[%s4 + $0x60] sm:$0xff] %v1020
    %1037 = vst [vmem:[%s4 + $0x68] sm:$0xff] %v1021
    %1038 = vst [vmem:[%s4 + $0x70] sm:$0xff] %v1022
    %1039 = vst [vmem:[%s4 + $0x78] sm:$0xff] %v1023
  $region29: #{mpnn_forward.1} parent=0 // pred_fallthru
    _
  // Predicated region
  $region30: #{mpnn_forward.1} parent=0 // pred_check
    _
  $region31: #{mpnn_forward.1} parent=0 // pred_check_branch
    %1041 = sbr.rel (0) target = $region33
  $region32: #{mpnn_forward.1} parent=0 // pred_region
    _
  $region33: #{mpnn_forward.1} parent=0 // pred_fallthru
    _
  // Predicated region
  $region34: #{mpnn_forward.1} parent=0 // pred_check
    _
  $region35: #{mpnn_forward.1} parent=0 // pred_check_branch
    %1043 = sbr.rel (0) target = $region37
  $region36: #{mpnn_forward.1} parent=0 // pred_region
    _
  $region37: #{mpnn_forward.1} parent=0 // pred_fallthru
    _

</llo_original>
